<compile_context>
chip_gen: v7x
topology: tpu7x:2x2x1
jax: 0.10.0
libtpu: 0.0.40
codegen_flags: <defaults>
</compile_context>

<pallas_src>
import jax
import jax.numpy as jnp
from jax.experimental import pallas as pl
from jax.experimental.pallas import tpu as pltpu


def _round_up(n, m):
    return ((n + m - 1) // m) * m


def _pad2d(a, rows, cols):
    """Zero-pad a 2-D array to (rows, cols); padded entries are exactly zero."""
    out = jnp.zeros((rows, cols), a.dtype)
    return out.at[: a.shape[0], : a.shape[1]].set(a)


def _policy_mlp_kernel(x_ref, w1_ref, b1_ref, w2_ref, b2_ref, w3_ref, b3_ref, out_ref):
    """Fused forward: relu(x@W1+b1) -> relu(.@W2+b2) -> .@W3+b3 (logits, f32).

    x_ref: (TB, state_dim) f32 (cast to bf16 in-kernel); weights bf16; biases f32;
    out_ref: (TB, action_dim) f32. All matmuls accumulate in f32 on the MXU.
    """
    x = x_ref[...].astype(jnp.bfloat16)
    h1 = jnp.dot(x, w1_ref[...], preferred_element_type=jnp.float32) + b1_ref[...]
    h1 = jnp.maximum(h1, 0.0).astype(jnp.bfloat16)
    h2 = jnp.dot(h1, w2_ref[...], preferred_element_type=jnp.float32) + b2_ref[...]
    h2 = jnp.maximum(h2, 0.0).astype(jnp.bfloat16)
    out_ref[...] = jnp.dot(h2, w3_ref[...], preferred_element_type=jnp.float32) + b3_ref[...]


def prepare_policy_params(params):
    """One-time: pad hidden dim to 128 lanes and cast weights to bf16 (biases stay f32).

    Call once per parameter update; reuse the result across forward calls so the padding /
    casting XLA ops do not run every step.  Padded rows/cols/lanes are exactly zero, so they
    contribute nothing through ReLU and never reach the (unpadded) output columns.
    """
    state_dim, hidden_dim = params["w1"].shape
    action_dim = params["w3"].shape[1]
    h_pad = _round_up(hidden_dim, 128)  # lane-dense hidden

    prepared = {
        "w1": _pad2d(params["w1"], state_dim, h_pad).astype(jnp.bfloat16),
        "w2": _pad2d(params["w2"], h_pad, h_pad).astype(jnp.bfloat16),
        "w3": _pad2d(params["w3"], h_pad, action_dim).astype(jnp.bfloat16),
        "b1": _pad2d(params["b1"].reshape(1, -1), 1, h_pad).astype(jnp.float32),
        "b2": _pad2d(params["b2"].reshape(1, -1), 1, h_pad).astype(jnp.float32),
        "b3": params["b3"].reshape(1, action_dim).astype(jnp.float32),
        "state_dim": state_dim,
        "hidden_dim": hidden_dim,
        "action_dim": action_dim,
        "h_pad": h_pad,
    }
    return prepared


def _choose_batch_tile(B, tile_rows):
    """Pick TB (mult of 16; mult of 256 when large) and B_pad (mult of TB)."""
    b16 = _round_up(B, 16)
    desired = _round_up(max(tile_rows, 16), 16)
    if desired >= 256:
        desired = _round_up(desired, 256)
    tb = min(desired, b16)
    # v7x has 2 TensorCores: for large batches make sure the "parallel" grid axis has
    # at least 2 steps so both cores get work.
    if b16 >= 512 and tb >= b16:
        tb = _round_up(-(-b16 // 2), 256)
    b_pad = _round_up(B, tb)
    return tb, b_pad


def policy_network_forward(x, prepared, *, tile_rows=1024):
    """x: (B, state_dim) float32. prepared: output of prepare_policy_params.

    Returns (B, action_dim) float32 logits (same semantics as PolicyNetwork.forward).
    """
    B, state_dim = x.shape
    assert state_dim == prepared["state_dim"]
    action_dim = prepared["action_dim"]
    h_pad = prepared["h_pad"]

    TB, B_pad = _choose_batch_tile(B, tile_rows)
    grid = (B_pad // TB,)

    # Only row-pad x if the batch is not a multiple of the tile; keep it f32 (the bf16
    # cast happens inside the kernel).
    if B_pad != B:
        x_p = jnp.zeros((B_pad, state_dim), x.dtype).at[:B].set(x)
    else:
        x_p = x

    flops = 2 * B_pad * (state_dim * h_pad + h_pad * h_pad + h_pad * action_dim)
    bytes_accessed = (
        B_pad * state_dim * 4                                            # x (f32)
        + (state_dim * h_pad + h_pad * h_pad + h_pad * action_dim) * 2   # weights (bf16)
        + (2 * h_pad + action_dim) * 4                                   # biases (f32)
        + B_pad * action_dim * 4                                         # logits (f32)
    )

    out = pl.pallas_call(
        _policy_mlp_kernel,
        out_shape=jax.ShapeDtypeStruct((B_pad, action_dim), jnp.float32),
        grid_spec=pltpu.PrefetchScalarGridSpec(
            num_scalar_prefetch=0,
            grid=grid,
            in_specs=[
                pl.BlockSpec((TB, state_dim), lambda i: (i, 0)),      # x: tiled over batch
                pl.BlockSpec((state_dim, h_pad), lambda i: (0, 0)),   # W1: VMEM-resident
                pl.BlockSpec((1, h_pad), lambda i: (0, 0)),           # b1
                pl.BlockSpec((h_pad, h_pad), lambda i: (0, 0)),       # W2
                pl.BlockSpec((1, h_pad), lambda i: (0, 0)),           # b2
                pl.BlockSpec((h_pad, action_dim), lambda i: (0, 0)),  # W3
                pl.BlockSpec((1, action_dim), lambda i: (0, 0)),      # b3
            ],
            out_specs=pl.BlockSpec((TB, action_dim), lambda i: (i, 0)),
        ),
        compiler_params=pltpu.CompilerParams(
            dimension_semantics=("parallel",),   # independent batch tiles (v7x: 2 TCs)
        ),
        cost_estimate=pl.CostEstimate(
            flops=flops, transcendentals=0, bytes_accessed=bytes_accessed
        ),
    )(x_p, prepared["w1"], prepared["b1"], prepared["w2"], prepared["b2"],
      prepared["w3"], prepared["b3"])

    return out[:B] if B_pad != B else out


def init_policy_params(key, state_dim, action_dim, hidden_dim=64):
    """Deterministic init mimicking nn.Linear default: uniform(-1/sqrt(fan_in), 1/sqrt(fan_in))."""
    keys = jax.random.split(key, 6)

    def linear_init(kw, kb, fan_in, fan_out):
        bound = 1.0 / jnp.sqrt(jnp.float32(fan_in))
        # stored as (in, out) so the kernel computes x @ W
        w = jax.random.uniform(kw, (fan_in, fan_out), jnp.float32, -bound, bound)
        b = jax.random.uniform(kb, (1, fan_out), jnp.float32, -bound, bound)
        return w, b

    w1, b1 = linear_init(keys[0], keys[1], state_dim, hidden_dim)
    w2, b2 = linear_init(keys[2], keys[3], hidden_dim, hidden_dim)
    w3, b3 = linear_init(keys[4], keys[5], hidden_dim, action_dim)
    return {"w1": w1, "b1": b1, "w2": w2, "b2": b2, "w3": w3, "b3": b3}


def _reference_forward_bf16(x, p):
    """Pure-JAX reference with the same bf16-operand / f32-accumulation numerics."""
    xb = x.astype(jnp.bfloat16)
    w1 = p["w1"].astype(jnp.bfloat16)
    w2 = p["w2"].astype(jnp.bfloat16)
    w3 = p["w3"].astype(jnp.bfloat16)
    h1 = jnp.maximum(jnp.dot(xb, w1, preferred_element_type=jnp.float32) + p["b1"], 0.0)
    h2 = jnp.maximum(
        jnp.dot(h1.astype(jnp.bfloat16), w2, preferred_element_type=jnp.float32) + p["b2"], 0.0
    )
    return jnp.dot(h2.astype(jnp.bfloat16), w3, preferred_element_type=jnp.float32) + p["b3"]


def _reference_forward_f32(x, p):
    h1 = jnp.maximum(x @ p["w1"] + p["b1"], 0.0)
    h2 = jnp.maximum(h1 @ p["w2"] + p["b2"], 0.0)
    return h2 @ p["w3"] + p["b3"]


if __name__ == "__main__":
    # CartPole-like problem size: state_dim=4, action_dim=2, hidden_dim=64, batch=8.
    # TODO(synk): get_action's softmax/multinomial sampling stays host-side JAX; only the
    # forward pass (logits) is implemented as a Pallas kernel.
    state_dim, action_dim, hidden_dim, batch = 4, 2, 64, 8

    key = jax.random.PRNGKey(0)
    k_params, k_x = jax.random.split(key)
    params = init_policy_params(k_params, state_dim, action_dim, hidden_dim)
    prepared = prepare_policy_params(params)   # one-time pad + bf16 cast, reused every call
    x = jax.random.normal(k_x, (batch, state_dim), jnp.float32)

    logits = policy_network_forward(x, prepared)
    logits = jax.block_until_ready(logits)

    assert logits.shape == (batch, action_dim)

    # Tight check vs a bf16-consistent reference (identical math; zero-padding is exact).
    ref_bf16 = _reference_forward_bf16(x, params)
    assert jnp.allclose(logits, ref_bf16, atol=1e-3, rtol=1e-3), "mismatch vs bf16 reference"

    # Coarse check vs the full-f32 reference (bf16 quantization error only).
    ref_f32 = _reference_forward_f32(x, params)
    assert jnp.allclose(logits, ref_f32, atol=5e-2, rtol=5e-2), "mismatch vs f32 reference"

    print("KERNEL_OK")
</pallas_src>

<mosaic_0001>
module attributes {stable_mosaic.version = 11 : i64} {
  func.func @_policy_mlp_kernel(%arg0: i32, %arg1: memref<16x4xf32, #tpu.memory_space<vmem>>, %arg2: memref<4x128xbf16, #tpu.memory_space<vmem>>, %arg3: memref<1x128xf32, #tpu.memory_space<vmem>>, %arg4: memref<128x128xbf16, #tpu.memory_space<vmem>>, %arg5: memref<1x128xf32, #tpu.memory_space<vmem>>, %arg6: memref<128x2xbf16, #tpu.memory_space<vmem>>, %arg7: memref<1x2xf32, #tpu.memory_space<vmem>>, %arg8: memref<16x2xf32, #tpu.memory_space<vmem>>) attributes {dimension_semantics = [#tpu.dimension_semantics<parallel>], iteration_bounds = array<i64: 1>, scalar_prefetch = 0 : i64, scratch_operands = 0 : i64, tpu.core_type = #tpu.core_type<tc>, window_params = [{transform_indices = @transform_0, window_bounds = array<i64: 16, 4>}, {pipeline_mode = #tpu.pipeline_mode<synchronous>, transform_indices = @transform_1, window_bounds = array<i64: 4, 128>}, {pipeline_mode = #tpu.pipeline_mode<synchronous>, transform_indices = @transform_2, window_bounds = array<i64: 1, 128>}, {pipeline_mode = #tpu.pipeline_mode<synchronous>, transform_indices = @transform_3, window_bounds = array<i64: 128, 128>}, {pipeline_mode = #tpu.pipeline_mode<synchronous>, transform_indices = @transform_4, window_bounds = array<i64: 1, 128>}, {pipeline_mode = #tpu.pipeline_mode<synchronous>, transform_indices = @transform_5, window_bounds = array<i64: 128, 2>}, {pipeline_mode = #tpu.pipeline_mode<synchronous>, transform_indices = @transform_6, window_bounds = array<i64: 1, 2>}, {transform_indices = @transform_7, window_bounds = array<i64: 16, 2>}]} {
    %c0 = arith.constant 0 : index
    %c0_0 = arith.constant 0 : index
    %0 = vector.load %arg1[%c0, %c0_0] : memref<16x4xf32, #tpu.memory_space<vmem>>, vector<16x4xf32>
    %1 = arith.truncf %0 : vector<16x4xf32> to vector<16x4xbf16>
    %c0_1 = arith.constant 0 : index
    %c0_2 = arith.constant 0 : index
    %2 = vector.load %arg2[%c0_1, %c0_2] : memref<4x128xbf16, #tpu.memory_space<vmem>>, vector<4x128xbf16>
    %cst = arith.constant dense<0.000000e+00> : vector<16x128xf32>
    %3 = tpu.matmul %1, %2, %cst {dimension_numbers = #tpu.dot_dimension_numbers<[1], [0], [0], [1], [0, 0, 1, 1], [], []>} : vector<16x4xbf16>, vector<4x128xbf16>, vector<16x128xf32> -> vector<16x128xf32>
    %c0_3 = arith.constant 0 : index
    %c0_4 = arith.constant 0 : index
    %4 = vector.load %arg3[%c0_3, %c0_4] : memref<1x128xf32, #tpu.memory_space<vmem>>, vector<1x128xf32>
    %5 = vector.broadcast %4 : vector<1x128xf32> to vector<16x128xf32>
    %6 = arith.addf %3, %5 : vector<16x128xf32>
    %cst_5 = arith.constant 0.000000e+00 : f32
    %7 = vector.broadcast %cst_5 : f32 to vector<16x128xf32>
    %8 = arith.maximumf %6, %7 : vector<16x128xf32>
    %9 = arith.truncf %8 : vector<16x128xf32> to vector<16x128xbf16>
    %c0_6 = arith.constant 0 : index
    %c0_7 = arith.constant 0 : index
    %10 = vector.load %arg4[%c0_6, %c0_7] : memref<128x128xbf16, #tpu.memory_space<vmem>>, vector<128x128xbf16>
    %cst_8 = arith.constant dense<0.000000e+00> : vector<16x128xf32>
    %11 = tpu.matmul %9, %10, %cst_8 {dimension_numbers = #tpu.dot_dimension_numbers<[1], [0], [0], [1], [0, 0, 1, 1], [], []>} : vector<16x128xbf16>, vector<128x128xbf16>, vector<16x128xf32> -> vector<16x128xf32>
    %c0_9 = arith.constant 0 : index
    %c0_10 = arith.constant 0 : index
    %12 = vector.load %arg5[%c0_9, %c0_10] : memref<1x128xf32, #tpu.memory_space<vmem>>, vector<1x128xf32>
    %13 = vector.broadcast %12 : vector<1x128xf32> to vector<16x128xf32>
    %14 = arith.addf %11, %13 : vector<16x128xf32>
    %cst_11 = arith.constant 0.000000e+00 : f32
    %15 = vector.broadcast %cst_11 : f32 to vector<16x128xf32>
    %16 = arith.maximumf %14, %15 : vector<16x128xf32>
    %17 = arith.truncf %16 : vector<16x128xf32> to vector<16x128xbf16>
    %c0_12 = arith.constant 0 : index
    %c0_13 = arith.constant 0 : index
    %18 = vector.load %arg6[%c0_12, %c0_13] : memref<128x2xbf16, #tpu.memory_space<vmem>>, vector<128x2xbf16>
    %cst_14 = arith.constant dense<0.000000e+00> : vector<16x2xf32>
    %19 = tpu.matmul %17, %18, %cst_14 {dimension_numbers = #tpu.dot_dimension_numbers<[1], [0], [0], [1], [0, 0, 1, 1], [], []>} : vector<16x128xbf16>, vector<128x2xbf16>, vector<16x2xf32> -> vector<16x2xf32>
    %c0_15 = arith.constant 0 : index
    %c0_16 = arith.constant 0 : index
    %20 = vector.load %arg7[%c0_15, %c0_16] : memref<1x2xf32, #tpu.memory_space<vmem>>, vector<1x2xf32>
    %21 = vector.broadcast %20 : vector<1x2xf32> to vector<16x2xf32>
    %22 = arith.addf %19, %21 : vector<16x2xf32>
    %c0_17 = arith.constant 0 : index
    %c0_18 = arith.constant 0 : index
    %23 = vector.load %arg8[%c0_17, %c0_18] : memref<16x2xf32, #tpu.memory_space<vmem>>, vector<16x2xf32>
    tpu.vector_store %arg8[%c0_17, %c0_18], %22 {strides = array<i32>} : memref<16x2xf32, #tpu.memory_space<vmem>>, vector<16x2xf32>,
    return
  }
  func.func @transform_0(%arg0: i32) -> (i32, i32) {
    %c0_i32 = arith.constant 0 : i32
    %c0_i32_0 = arith.constant 0 : i32
    return %arg0, %c0_i32 : i32, i32
  }
  func.func @transform_1(%arg0: i32) -> (i32, i32) {
    %c0_i32 = arith.constant 0 : i32
    %c0_i32_0 = arith.constant 0 : i32
    %c0_i32_1 = arith.constant 0 : i32
    return %c0_i32, %c0_i32_0 : i32, i32
  }
  func.func @transform_2(%arg0: i32) -> (i32, i32) {
    %c0_i32 = arith.constant 0 : i32
    %c0_i32_0 = arith.constant 0 : i32
    %c0_i32_1 = arith.constant 0 : i32
    return %c0_i32, %c0_i32_0 : i32, i32
  }
  func.func @transform_3(%arg0: i32) -> (i32, i32) {
    %c0_i32 = arith.constant 0 : i32
    %c0_i32_0 = arith.constant 0 : i32
    %c0_i32_1 = arith.constant 0 : i32
    return %c0_i32, %c0_i32_0 : i32, i32
  }
  func.func @transform_4(%arg0: i32) -> (i32, i32) {
    %c0_i32 = arith.constant 0 : i32
    %c0_i32_0 = arith.constant 0 : i32
    %c0_i32_1 = arith.constant 0 : i32
    return %c0_i32, %c0_i32_0 : i32, i32
  }
  func.func @transform_5(%arg0: i32) -> (i32, i32) {
    %c0_i32 = arith.constant 0 : i32
    %c0_i32_0 = arith.constant 0 : i32
    %c0_i32_1 = arith.constant 0 : i32
    return %c0_i32, %c0_i32_0 : i32, i32
  }
  func.func @transform_6(%arg0: i32) -> (i32, i32) {
    %c0_i32 = arith.constant 0 : i32
    %c0_i32_0 = arith.constant 0 : i32
    %c0_i32_1 = arith.constant 0 : i32
    return %c0_i32, %c0_i32_0 : i32, i32
  }
  func.func @transform_7(%arg0: i32) -> (i32, i32) {
    %c0_i32 = arith.constant 0 : i32
    %c0_i32_0 = arith.constant 0 : i32
    return %arg0, %c0_i32 : i32, i32
  }
}

</mosaic_0001>

<llo_original>
// kernel: tpu_custom_call.1
$region0: #{tpu_custom_call.1}
  #allocation0 [shape = 'u32[]', space=smem, size = 0x4, offset = 0x4, fixed_abs, tag = 'smem constant byte address 0x4 - core index']
  #allocation1 [shape = 'u32[144,128]{1,0:T(1,128)}', space=vmem, size = 0x12000, scoped, tag = 'internal scratch']
  %s0 = inlined_call_operand.vmem [shape: f32[16,4], index: 0, kind: input, shape index: {}]
  %s1 = inlined_call_operand.vmem [shape: bf16[4,128], index: 1, kind: input, shape index: {}]
  %s2 = inlined_call_operand.vmem [shape: f32[1,128], index: 2, kind: input, shape index: {}]
  %s3 = inlined_call_operand.vmem [shape: bf16[128,128], index: 3, kind: input, shape index: {}]
  %s4 = inlined_call_operand.vmem [shape: f32[1,128], index: 4, kind: input, shape index: {}]
  %s5 = inlined_call_operand.vmem [shape: bf16[128,2], index: 5, kind: input, shape index: {}]
  %s6 = inlined_call_operand.vmem [shape: f32[1,2], index: 6, kind: input, shape index: {}]
  %s7 = inlined_call_operand.vmem [shape: f32[16,2], index: 7, kind: output, shape index: {}]
  %s8 = sld [smem:[#allocation0]]
  $region38: #{tpu_custom_call.1} parent=0
    _
  %s10 = ssub.s32 1, %s8
  %s11 = scalar_select 0, %s10, %s8
  // Predicated region
  $region2: #{tpu_custom_call.1} parent=0 // pred_check
    _
  $region3: #{tpu_custom_call.1} parent=0 // pred_check_branch
    %13 = sbr.rel (0) target = $region5
  $region4: #{tpu_custom_call.1} parent=0 // pred_region
    _
  $region5: #{tpu_custom_call.1} parent=0 // pred_fallthru
    _
  // Predicated region
  $region6: #{tpu_custom_call.1} parent=0 // pred_check
    _
  $region7: #{tpu_custom_call.1} parent=0 // pred_check_branch
    %15 = sbr.rel (0) target = $region9
  $region8: #{tpu_custom_call.1} parent=0 // pred_region
    _
  $region9: #{tpu_custom_call.1} parent=0 // pred_fallthru
    _
  // Predicated region
  $region10: #{tpu_custom_call.1} parent=0 // pred_check
    _
  $region11: #{tpu_custom_call.1} parent=0 // pred_check_branch
    %17 = sbr.rel (0) target = $region13
  $region12: #{tpu_custom_call.1} parent=0 // pred_region
    _
  $region13: #{tpu_custom_call.1} parent=0 // pred_fallthru
    _
  // Predicated region
  $region14: #{tpu_custom_call.1} parent=0 // pred_check
    _
  $region15: #{tpu_custom_call.1} parent=0 // pred_check_branch
    %19 = sbr.rel (0) target = $region17
  $region16: #{tpu_custom_call.1} parent=0 // pred_region
    _
  $region17: #{tpu_custom_call.1} parent=0 // pred_fallthru
    _
  // Predicated region
  $region18: #{tpu_custom_call.1} parent=0 // pred_check
    _
  $region19: #{tpu_custom_call.1} parent=0 // pred_check_branch
    %21 = sbr.rel (0) target = $region21
  $region20: #{tpu_custom_call.1} parent=0 // pred_region
    _
  $region21: #{tpu_custom_call.1} parent=0 // pred_fallthru
    _
  // Predicated region
  $region22: #{tpu_custom_call.1} parent=0 // pred_check
    _
  $region23: #{tpu_custom_call.1} parent=0 // pred_check_branch
    %23 = sbr.rel (0) target = $region25
  $region24: #{tpu_custom_call.1} parent=0 // pred_region
    _
  $region25: #{tpu_custom_call.1} parent=0 // pred_fallthru
    _
  // Predicated region
  $region26: #{tpu_custom_call.1} parent=0 // pred_check
    _
  $region27: #{tpu_custom_call.1} parent=0 // pred_check_branch
    %25 = sbr.rel (0) target = $region29
  $region28: #{tpu_custom_call.1} parent=0 // pred_region
    _
  $region29: #{tpu_custom_call.1} parent=0 // pred_fallthru
    _
  %v27 = vld [vmem:[%s0] sm:$0xff]
  %v28 = vld [vmem:[%s0 + $0x8] sm:$0xff]
  %v29 = vpack.c.bf16 %v28, %v27
  %v30 = vld [vmem:[%s1] sm:$0x3]
  %v31 = vld [vmem:[%s2] sm:$0x1]
  %v33 = vlaneseq
  %v34 = vshrl.u32 %v33, 7
  %v35 = vsub.s32 0, %v34
  %v36 = vrot.slane %v31, %v35
  %vm38 = vcmask 31744
  %v40 = vsel %vm38, %v29, 0
  %vm42 = vcmask 1041408
  %v44 = vsel %vm42, %v30, 0
  %46 = vmatprep.subr.bf16.mxu0 0
  %47 = vmatpush1.bf16.msra.mxu0 %v44
  %48 = vmatprep.subr.bf16.mxu0 0
  %49 = vmatpush1.bf16.msra.mxu0 0
  %50 = vmatprep.subr.bf16.mxu0 0
  %51 = vmatpush1.bf16.msra.mxu0 0
  %52 = vmatprep.subr.bf16.mxu0 0
  %53 = vmatpush1.bf16.msra.mxu0 0
  %54 = vmatprep.subr.bf16.mxu0 0
  %55 = vmatpush1.bf16.msra.mxu0 0
  %56 = vmatprep.subr.bf16.mxu0 0
  %57 = vmatpush1.bf16.msra.mxu0 0
  %58 = vmatprep.subr.bf16.mxu0 0
  %59 = vmatpush1.bf16.msra.mxu0 0
  %60 = vmatprep.subr.bf16.mxu0 0
  %61 = vmatpush1.bf16.msra.mxu0 0
  %62 = vmatprep.subr.bf16.mxu0 0
  %63 = vmatpush1.bf16.msra.mxu0 0
  %64 = vmatprep.subr.bf16.mxu0 0
  %65 = vmatpush1.bf16.msra.mxu0 0
  %66 = vmatprep.subr.bf16.mxu0 0
  %67 = vmatpush1.bf16.msra.mxu0 0
  %68 = vmatprep.subr.bf16.mxu0 0
  %69 = vmatpush1.bf16.msra.mxu0 0
  %70 = vmatprep.subr.bf16.mxu0 0
  %71 = vmatpush1.bf16.msra.mxu0 0
  %72 = vmatprep.subr.bf16.mxu0 0
  %73 = vmatpush1.bf16.msra.mxu0 0
  %74 = vmatprep.subr.bf16.mxu0 0
  %75 = vmatpush1.bf16.msra.mxu0 0
  %76 = vmatprep.subr.bf16.mxu0 0
  %77 = vmatpush1.bf16.msra.mxu0 0
  %78 = vmatprep.mubr.bf16.mxu0 0
  %79 = vmatmul.mubr.bf16.gmra.mrb[0].mxu0 %v40
  %v80 = vpop.f32.mrb[0].mxu0
  %v81 = vadd.f32 %v36, %v80
  %v82 = vpop.f32.mrb[0].mxu0
  %v83 = vpop.f32.mrb[0].mxu0
  %v84 = vadd.f32 %v36, %v83
  %v85 = vpop.f32.mrb[0].mxu0
  %86 = vdwg.mxu0
  %v87 = vmax.f32 %v81, 0.0
  %v88 = vmax.f32 %v84, 0.0
  %v89 = vpack.c.bf16 %v88, %v87
  %v90 = vld [vmem:[%s3] sm:$0xf]
  %v91 = vld [vmem:[%s3 + $0x4] sm:$0xf]
  %v92 = vld [vmem:[%s3 + $0x8] sm:$0xf]
  %v93 = vld [vmem:[%s3 + $0xc] sm:$0xf]
  %v94 = vld [vmem:[%s3 + $0x10] sm:$0xf]
  %v95 = vld [vmem:[%s3 + $0x14] sm:$0xf]
  %v96 = vld [vmem:[%s3 + $0x18] sm:$0xf]
  %v97 = vld [vmem:[%s3 + $0x1c] sm:$0xf]
  %v98 = vld [vmem:[%s3 + $0x20] sm:$0xf]
  %v99 = vld [vmem:[%s3 + $0x24] sm:$0xf]
  %v100 = vld [vmem:[%s3 + $0x28] sm:$0xf]
  %v101 = vld [vmem:[%s3 + $0x2c] sm:$0xf]
  %v102 = vld [vmem:[%s3 + $0x30] sm:$0xf]
  %v103 = vld [vmem:[%s3 + $0x34] sm:$0xf]
  %v104 = vld [vmem:[%s3 + $0x38] sm:$0xf]
  %v105 = vld [vmem:[%s3 + $0x3c] sm:$0xf]
  %v106 = vld [vmem:[%s4] sm:$0x1]
  %v108 = vlaneseq
  %v109 = vshrl.u32 %v108, 7
  %v110 = vsub.s32 0, %v109
  %v111 = vrot.slane %v106, %v110
  %v129 = vunpack.c.l.b16 %v90
  %v130 = vunpack.c.l.b16 %v91
  %v131 = vunpack.c.l.b16 %v92
  %v132 = vunpack.c.l.b16 %v93
  %v133 = vunpack.c.l.b16 %v94
  %v134 = vunpack.c.l.b16 %v95
  %v135 = vunpack.c.l.b16 %v96
  %v136 = vunpack.c.l.b16 %v97
  %v137 = vunpack.c.l.b16 %v98
  %v138 = vunpack.c.l.b16 %v99
  %v139 = vunpack.c.l.b16 %v100
  %v140 = vunpack.c.l.b16 %v101
  %v141 = vunpack.c.l.b16 %v102
  %v142 = vunpack.c.l.b16 %v103
  %v143 = vunpack.c.l.b16 %v104
  %v144 = vunpack.c.l.b16 %v105
  %v145 = vpack.c.b16 %v130, %v129
  %v146 = vpack.c.b16 %v132, %v131
  %v147 = vpack.c.b16 %v134, %v133
  %v148 = vpack.c.b16 %v136, %v135
  %v149 = vpack.c.b16 %v138, %v137
  %v150 = vpack.c.b16 %v140, %v139
  %v151 = vpack.c.b16 %v142, %v141
  %v152 = vpack.c.b16 %v144, %v143
  %161 = vmatprep.subr.bf16.mxu0 0
  %162 = vmatpush1.bf16.msra.mxu0 %v145
  %163 = vmatprep.subr.bf16.mxu0 0
  %164 = vmatpush1.bf16.msra.mxu0 %v146
  %165 = vmatprep.subr.bf16.mxu0 0
  %166 = vmatpush1.bf16.msra.mxu0 %v147
  %167 = vmatprep.subr.bf16.mxu0 0
  %168 = vmatpush1.bf16.msra.mxu0 %v148
  %169 = vmatprep.subr.bf16.mxu0 0
  %170 = vmatpush1.bf16.msra.mxu0 %v149
  %171 = vmatprep.subr.bf16.mxu0 0
  %172 = vmatpush1.bf16.msra.mxu0 %v150
  %173 = vmatprep.subr.bf16.mxu0 0
  %174 = vmatpush1.bf16.msra.mxu0 %v151
  %175 = vmatprep.subr.bf16.mxu0 0
  %176 = vmatpush1.bf16.msra.mxu0 %v152
  %177 = vmatprep.subr.bf16.mxu0 0
  %178 = vmatpush1.bf16.msra.mxu0 0
  %179 = vmatprep.subr.bf16.mxu0 0
  %180 = vmatpush1.bf16.msra.mxu0 0
  %181 = vmatprep.subr.bf16.mxu0 0
  %182 = vmatpush1.bf16.msra.mxu0 0
  %183 = vmatprep.subr.bf16.mxu0 0
  %184 = vmatpush1.bf16.msra.mxu0 0
  %185 = vmatprep.subr.bf16.mxu0 0
  %186 = vmatpush1.bf16.msra.mxu0 0
  %187 = vmatprep.subr.bf16.mxu0 0
  %188 = vmatpush1.bf16.msra.mxu0 0
  %189 = vmatprep.subr.bf16.mxu0 0
  %190 = vmatpush1.bf16.msra.mxu0 0
  %191 = vmatprep.subr.bf16.mxu0 0
  %192 = vmatpush1.bf16.msra.mxu0 0
  %193 = vmatprep.mubr.bf16.mxu0 0
  %194 = vmatmul.mubr.bf16.gmra.mrb[0].mxu0 %v89
  %v195 = vpop.f32.mrb[0].mxu0
  %v196 = vadd.f32 %v111, %v195
  %v197 = vpop.f32.mrb[0].mxu0
  %v198 = vpop.f32.mrb[0].mxu0
  %v199 = vadd.f32 %v111, %v198
  %v200 = vpop.f32.mrb[0].mxu0
  %201 = vdwg.mxu0
  %v202 = vmax.f32 %v196, 0.0
  %v203 = vmax.f32 %v199, 0.0
  %v204 = vpack.c.bf16 %v203, %v202
  %v205 = vld [vmem:[%s5] sm:$0xf]
  %v206 = vld [vmem:[%s5 + $0x4] sm:$0xf]
  %v207 = vld [vmem:[%s5 + $0x8] sm:$0xf]
  %v208 = vld [vmem:[%s5 + $0xc] sm:$0xf]
  %v209 = vld [vmem:[%s5 + $0x10] sm:$0xf]
  %v210 = vld [vmem:[%s5 + $0x14] sm:$0xf]
  %v211 = vld [vmem:[%s5 + $0x18] sm:$0xf]
  %v212 = vld [vmem:[%s5 + $0x1c] sm:$0xf]
  %v213 = vld [vmem:[%s5 + $0x20] sm:$0xf]
  %v214 = vld [vmem:[%s5 + $0x24] sm:$0xf]
  %v215 = vld [vmem:[%s5 + $0x28] sm:$0xf]
  %v216 = vld [vmem:[%s5 + $0x2c] sm:$0xf]
  %v217 = vld [vmem:[%s5 + $0x30] sm:$0xf]
  %v218 = vld [vmem:[%s5 + $0x34] sm:$0xf]
  %v219 = vld [vmem:[%s5 + $0x38] sm:$0xf]
  %v220 = vld [vmem:[%s5 + $0x3c] sm:$0xf]
  %v221 = vld [vmem:[%s6] sm:$0x1]
  %v223 = vlaneseq
  %v224 = vshrl.u32 %v223, 7
  %v225 = vsub.s32 0, %v224
  %v226 = vrot.slane %v221, %v225
  %v244 = vunpack.c.l.b16 %v205
  %v245 = vunpack.c.l.b16 %v206
  %v246 = vunpack.c.l.b16 %v207
  %v247 = vunpack.c.l.b16 %v208
  %v248 = vunpack.c.l.b16 %v209
  %v249 = vunpack.c.l.b16 %v210
  %v250 = vunpack.c.l.b16 %v211
  %v251 = vunpack.c.l.b16 %v212
  %v252 = vunpack.c.l.b16 %v213
  %v253 = vunpack.c.l.b16 %v214
  %v254 = vunpack.c.l.b16 %v215
  %v255 = vunpack.c.l.b16 %v216
  %v256 = vunpack.c.l.b16 %v217
  %v257 = vunpack.c.l.b16 %v218
  %v258 = vunpack.c.l.b16 %v219
  %v259 = vunpack.c.l.b16 %v220
  %v260 = vpack.c.b16 %v245, %v244
  %v261 = vpack.c.b16 %v247, %v246
  %v262 = vpack.c.b16 %v249, %v248
  %v263 = vpack.c.b16 %v251, %v250
  %v264 = vpack.c.b16 %v253, %v252
  %v265 = vpack.c.b16 %v255, %v254
  %v266 = vpack.c.b16 %v257, %v256
  %v267 = vpack.c.b16 %v259, %v258
  %276 = vmatprep.subr.bf16.mxu0 0
  %277 = vmatpush1.bf16.msra.mxu0 %v260
  %278 = vmatprep.subr.bf16.mxu0 0
  %279 = vmatpush1.bf16.msra.mxu0 %v261
  %280 = vmatprep.subr.bf16.mxu0 0
  %281 = vmatpush1.bf16.msra.mxu0 %v262
  %282 = vmatprep.subr.bf16.mxu0 0
  %283 = vmatpush1.bf16.msra.mxu0 %v263
  %284 = vmatprep.subr.bf16.mxu0 0
  %285 = vmatpush1.bf16.msra.mxu0 %v264
  %286 = vmatprep.subr.bf16.mxu0 0
  %287 = vmatpush1.bf16.msra.mxu0 %v265
  %288 = vmatprep.subr.bf16.mxu0 0
  %289 = vmatpush1.bf16.msra.mxu0 %v266
  %290 = vmatprep.subr.bf16.mxu0 0
  %291 = vmatpush1.bf16.msra.mxu0 %v267
  %292 = vmatprep.subr.bf16.mxu0 0
  %293 = vmatpush1.bf16.msra.mxu0 0
  %294 = vmatprep.subr.bf16.mxu0 0
  %295 = vmatpush1.bf16.msra.mxu0 0
  %296 = vmatprep.subr.bf16.mxu0 0
  %297 = vmatpush1.bf16.msra.mxu0 0
  %298 = vmatprep.subr.bf16.mxu0 0
  %299 = vmatpush1.bf16.msra.mxu0 0
  %300 = vmatprep.subr.bf16.mxu0 0
  %301 = vmatpush1.bf16.msra.mxu0 0
  %302 = vmatprep.subr.bf16.mxu0 0
  %303 = vmatpush1.bf16.msra.mxu0 0
  %304 = vmatprep.subr.bf16.mxu0 0
  %305 = vmatpush1.bf16.msra.mxu0 0
  %306 = vmatprep.subr.bf16.mxu0 0
  %307 = vmatpush1.bf16.msra.mxu0 0
  %308 = vmatprep.mubr.bf16.mxu0 0
  %309 = vmatmul.mubr.bf16.gmra.mrb[0].mxu0 %v204
  %v310 = vpop.f32.mrb[0].mxu0
  %v311 = vadd.f32 %v226, %v310
  %v312 = vpop.f32.mrb[0].mxu0
  %v313 = vpop.f32.mrb[0].mxu0
  %v314 = vadd.f32 %v226, %v313
  %v315 = vpop.f32.mrb[0].mxu0
  %316 = vdwg.mxu0
  %vm317 = vcmask 15360
  %318 = vst.msk [vmem:[%s7] sm:$0xff] %vm317, %v311
  %319 = vst.msk [vmem:[%s7 + $0x8] sm:$0xff] %vm317, %v314
  // Predicated region
  $region30: #{tpu_custom_call.1} parent=0 // pred_check
    _
  $region31: #{tpu_custom_call.1} parent=0 // pred_check_branch
    %321 = sbr.rel (0) target = $region33
  $region32: #{tpu_custom_call.1} parent=0 // pred_region
    _
  $region33: #{tpu_custom_call.1} parent=0 // pred_fallthru
    _
  // Predicated region
  $region34: #{tpu_custom_call.1} parent=0 // pred_check
    _
  $region35: #{tpu_custom_call.1} parent=0 // pred_check_branch
    %323 = sbr.rel (0) target = $region37
  $region36: #{tpu_custom_call.1} parent=0 // pred_region
    _
  $region37: #{tpu_custom_call.1} parent=0 // pred_fallthru
    _

</llo_original>
